<compile_context>
chip_gen: v7x
topology: tpu7x:2x2x1
jax: 0.10.0
libtpu: 0.0.40
codegen_flags: <defaults>
</compile_context>

<pallas_src>
import functools

import jax
import jax.numpy as jnp
from jax import lax
from jax.experimental import pallas as pl
from jax.experimental.pallas import tpu as pltpu


def _dense_kernel(x_ref, w_ref, out_ref, *, H, W):
    # x_ref:   (Nb, C, H*W)     batch block; channels on sublanes, spatial on lanes
    # w_ref:   (G, 9*C + 1)     BN-scale-folded conv weights + BN-shift column
    # out_ref: (Nb, C+G, H*W)   [x ; relu(bn(conv(x)))]   (fused channel concat)
    Nb, C, HW = x_ref.shape

    # Lane-position helpers for the zero-padding halo masks.  Each slab row
    # holds one image's flattened H*W, so these masks are per-image by
    # construction (no cross-image leakage from the lane rolls).
    p = lax.broadcasted_iota(jnp.int32, (1, HW), 1)
    if (W & (W - 1)) == 0:
        xx = jnp.bitwise_and(p, W - 1)        # p % W (W is a power of two)
    else:
        xx = p % W

    # Precompute the 9 tap shifts + halo masks once (shared across the batch).
    taps = []
    for ky in range(3):
        for kx in range(3):
            sy, sx = ky - 1, kx - 1
            conds = []
            if sy < 0:
                conds.append(p >= W)                 # y - 1 >= 0
            elif sy > 0:
                conds.append(p < (H - 1) * W)        # y + 1 <= H - 1
            if sx < 0:
                conds.append(xx >= 1)                # x - 1 >= 0
            elif sx > 0:
                conds.append(xx < W - 1)             # x + 1 <= W - 1
            m = None
            for c in conds:
                m = c if m is None else (m & c)
            taps.append((sy * W + sx, m))

    ones_row = jnp.ones((1, HW), dtype=jnp.float32)  # bias row -> BN shift

    for n in range(Nb):          # static unroll: whole batch in ONE grid step
        x = x_ref[n]                                  # (C, HW)

        # im2col slab as a value (stays in vregs, no VMEM scratch round-trip).
        rows = []
        for delta, m in taps:
            if delta == 0:
                slab = x
            else:
                # slab[p] = x[p + delta]   (np.roll semantics on the lane axis)
                slab = pltpu.roll(x, (-delta) % HW, axis=1)
            if m is not None:
                slab = jnp.where(m, slab, 0.0)
            rows.append(slab)
        rows.append(ones_row)
        xim = jnp.concatenate(rows, axis=0)           # (9*C + 1, HW)

        # Single MXU matmul per image: (G, 9C+1) @ (9C+1, HW) -> (G, HW).
        # Conv + BN (scale folded into w, shift via the ones row), then ReLU.
        y = jnp.dot(w_ref[...], xim, preferred_element_type=jnp.float32)
        y = jnp.maximum(y, 0.0)

        # Fused channel concat: one lane-dense (C+G, HW) store per image.
        out_ref[n] = jnp.concatenate(
            [x.astype(out_ref.dtype), y.astype(out_ref.dtype)], axis=0)


def make_dense_forward(x_nchw, weight_hwio, gamma, beta, running_mean,
                       running_var, eps=1e-5):
    """x_nchw: (N, C, H, W) f32.  Returns (N, C+G, H, W) f32."""
    N, C, H, W = x_nchw.shape
    G = weight_hwio.shape[-1]
    HW = H * W

    # Fold eval-mode BatchNorm into the conv: w' = w * scale; the shift
    # becomes an extra weight column contracted against an in-kernel ones row.
    scale = (gamma / jnp.sqrt(running_var + eps)).astype(jnp.float32)        # (G,)
    shift = (beta - running_mean * scale).reshape(G, 1).astype(jnp.float32)  # (G,1)
    # HWIO * scale -> (G, ky, kx, c) -> (G, 9*C); row order t*C + c with
    # t = ky*3 + kx matches the in-kernel im2col stacking order.
    w_mat = jnp.transpose(weight_hwio * scale, (3, 0, 1, 2)).reshape(G, 9 * C)
    w_aug = jnp.concatenate([w_mat, shift], axis=1).astype(jnp.float32)  # (G, 9C+1)

    x_flat = x_nchw.reshape(N, C, HW)     # free reshape, no copy / transpose

    # Whole batch in one grid step: at these sizes the kernel is
    # launch/overhead-bound, so per-image grid steps cost more than they buy.
    # For very large N on v7x, raise batch_blocks (>=2) so both TensorCores
    # get work; each block must still fit VMEM (tiny here).
    batch_blocks = 1
    nb = N // batch_blocks

    out = pl.pallas_call(
        functools.partial(_dense_kernel, H=H, W=W),
        out_shape=jax.ShapeDtypeStruct((N, C + G, HW), x_nchw.dtype),
        grid=(batch_blocks,),
        in_specs=[
            pl.BlockSpec((nb, C, HW), lambda i: (i, 0, 0)),
            pl.BlockSpec((G, 9 * C + 1), lambda i: (0, 0)),
        ],
        out_specs=pl.BlockSpec((nb, C + G, HW), lambda i: (i, 0, 0)),
        compiler_params=pltpu.CompilerParams(
            dimension_semantics=("parallel",)),
    )(x_flat, w_aug)

    return out.reshape(N, C + G, H, W)    # free reshape back to NCHW


def _reference(x_nchw, weight_hwio, gamma, beta, running_mean, running_var,
               eps=1e-5):
    x_nhwc = jnp.transpose(x_nchw, (0, 2, 3, 1))
    conv = lax.conv_general_dilated(
        x_nhwc, weight_hwio, window_strides=(1, 1), padding="SAME",
        dimension_numbers=("NHWC", "HWIO", "NHWC"))
    scale = gamma / jnp.sqrt(running_var + eps)
    shift = beta - running_mean * scale
    y = jnp.maximum(conv * scale + shift, 0.0)
    out_nhwc = jnp.concatenate([x_nhwc, y], axis=-1)
    return jnp.transpose(out_nhwc, (0, 3, 1, 2))


if __name__ == "__main__":
    # make_dense(nChannels=4, growthRate=8, is_batchnorm=True, kernel_size=3)
    # (the is_batchnorm=False branch is the same kernel with gamma=1, beta=0,
    #  running_mean=0, running_var=1.)
    N, C, H, W = 2, 4, 16, 16
    G = 8

    key = jax.random.PRNGKey(0)
    k_x, k_w, k_g, k_b = jax.random.split(key, 4)

    x = jax.random.normal(k_x, (N, C, H, W), dtype=jnp.float32)
    # Conv2d weight: PyTorch OIHW -> HWIO.
    w_oihw = 0.1 * jax.random.normal(k_w, (G, C, 3, 3), dtype=jnp.float32)
    w_hwio = jnp.transpose(w_oihw, (2, 3, 1, 0))
    # BatchNorm2d params (eval-mode running stats).
    gamma = 1.0 + 0.1 * jax.random.normal(k_g, (G,), dtype=jnp.float32)
    beta = 0.1 * jax.random.normal(k_b, (G,), dtype=jnp.float32)
    running_mean = jnp.zeros((G,), dtype=jnp.float32)
    running_var = jnp.ones((G,), dtype=jnp.float32)

    out = make_dense_forward(x, w_hwio, gamma, beta, running_mean, running_var)
    out = jax.block_until_ready(out)

    ref = _reference(x, w_hwio, gamma, beta, running_mean, running_var)
    assert out.shape == (N, C + G, H, W)
    assert jnp.allclose(out, ref, atol=1e-4, rtol=1e-4), "mismatch vs reference"

    print("KERNEL_OK")
</pallas_src>

<mosaic_0001>
module attributes {stable_mosaic.version = 11 : i64} {
  func.func @_dense_kernel(%arg0: i32, %arg1: memref<2x4x256xf32, #tpu.memory_space<vmem>>, %arg2: memref<8x37xf32, #tpu.memory_space<vmem>>, %arg3: memref<2x12x256xf32, #tpu.memory_space<vmem>>) attributes {dimension_semantics = [#tpu.dimension_semantics<parallel>], iteration_bounds = array<i64: 1>, scalar_prefetch = 0 : i64, scratch_operands = 0 : i64, tpu.core_type = #tpu.core_type<tc>, window_params = [{transform_indices = @transform_0, window_bounds = array<i64: 2, 4, 256>}, {pipeline_mode = #tpu.pipeline_mode<synchronous>, transform_indices = @transform_1, window_bounds = array<i64: 8, 37>}, {transform_indices = @transform_2, window_bounds = array<i64: 2, 12, 256>}]} {
    %0 = tpu.iota {dimensions = array<i32: 1>} : vector<1x256xi32>
    %c15_i32 = arith.constant 15 : i32
    %1 = vector.broadcast %c15_i32 : i32 to vector<1x256xi32>
    %2 = arith.andi %0, %1 : vector<1x256xi32>
    %c16_i32 = arith.constant 16 : i32
    %3 = vector.broadcast %c16_i32 : i32 to vector<1x256xi32>
    %4 = arith.cmpi sge, %0, %3 : vector<1x256xi32>
    %c1_i32 = arith.constant 1 : i32
    %5 = vector.broadcast %c1_i32 : i32 to vector<1x256xi32>
    %6 = arith.cmpi sge, %2, %5 : vector<1x256xi32>
    %7 = arith.andi %4, %6 : vector<1x256xi1>
    %c16_i32_0 = arith.constant 16 : i32
    %8 = vector.broadcast %c16_i32_0 : i32 to vector<1x256xi32>
    %9 = arith.cmpi sge, %0, %8 : vector<1x256xi32>
    %c16_i32_1 = arith.constant 16 : i32
    %10 = vector.broadcast %c16_i32_1 : i32 to vector<1x256xi32>
    %11 = arith.cmpi sge, %0, %10 : vector<1x256xi32>
    %c15_i32_2 = arith.constant 15 : i32
    %12 = vector.broadcast %c15_i32_2 : i32 to vector<1x256xi32>
    %13 = arith.cmpi slt, %2, %12 : vector<1x256xi32>
    %14 = arith.andi %11, %13 : vector<1x256xi1>
    %c1_i32_3 = arith.constant 1 : i32
    %15 = vector.broadcast %c1_i32_3 : i32 to vector<1x256xi32>
    %16 = arith.cmpi sge, %2, %15 : vector<1x256xi32>
    %c15_i32_4 = arith.constant 15 : i32
    %17 = vector.broadcast %c15_i32_4 : i32 to vector<1x256xi32>
    %18 = arith.cmpi slt, %2, %17 : vector<1x256xi32>
    %c240_i32 = arith.constant 240 : i32
    %19 = vector.broadcast %c240_i32 : i32 to vector<1x256xi32>
    %20 = arith.cmpi slt, %0, %19 : vector<1x256xi32>
    %c1_i32_5 = arith.constant 1 : i32
    %21 = vector.broadcast %c1_i32_5 : i32 to vector<1x256xi32>
    %22 = arith.cmpi sge, %2, %21 : vector<1x256xi32>
    %23 = arith.andi %20, %22 : vector<1x256xi1>
    %c240_i32_6 = arith.constant 240 : i32
    %24 = vector.broadcast %c240_i32_6 : i32 to vector<1x256xi32>
    %25 = arith.cmpi slt, %0, %24 : vector<1x256xi32>
    %c240_i32_7 = arith.constant 240 : i32
    %26 = vector.broadcast %c240_i32_7 : i32 to vector<1x256xi32>
    %27 = arith.cmpi slt, %0, %26 : vector<1x256xi32>
    %c15_i32_8 = arith.constant 15 : i32
    %28 = vector.broadcast %c15_i32_8 : i32 to vector<1x256xi32>
    %29 = arith.cmpi slt, %2, %28 : vector<1x256xi32>
    %30 = arith.andi %27, %29 : vector<1x256xi1>
    %cst = arith.constant 1.000000e+00 : f32
    %31 = vector.broadcast %cst : f32 to vector<1x256xf32>
    %c0 = arith.constant 0 : index
    %c0_9 = arith.constant 0 : index
    %c0_10 = arith.constant 0 : index
    %32 = vector.load %arg1[%c0, %c0_9, %c0_10] : memref<2x4x256xf32, #tpu.memory_space<vmem>>, vector<1x4x256xf32>
    %33 = vector.shape_cast %32 : vector<1x4x256xf32> to vector<4x256xf32>
    %c17_i32 = arith.constant 17 : i32
    %34 = tpu.dynamic_rotate %33 by %c17_i32 dim 1 : vector<4x256xf32>, i32 -> vector<4x256xf32>
    %cst_11 = arith.constant 0.000000e+00 : f32
    %35 = vector.shape_cast %7 : vector<1x256xi1> to vector<1x256xi1>
    %36 = vector.broadcast %35 : vector<1x256xi1> to vector<4x256xi1>
    %37 = vector.broadcast %cst_11 : f32 to vector<4x256xf32>
    %38 = arith.select %36, %34, %37 : vector<4x256xi1>, vector<4x256xf32>
    %c16_i32_12 = arith.constant 16 : i32
    %39 = tpu.dynamic_rotate %33 by %c16_i32_12 dim 1 : vector<4x256xf32>, i32 -> vector<4x256xf32>
    %cst_13 = arith.constant 0.000000e+00 : f32
    %40 = vector.shape_cast %9 : vector<1x256xi1> to vector<1x256xi1>
    %41 = vector.broadcast %40 : vector<1x256xi1> to vector<4x256xi1>
    %42 = vector.broadcast %cst_13 : f32 to vector<4x256xf32>
    %43 = arith.select %41, %39, %42 : vector<4x256xi1>, vector<4x256xf32>
    %c15_i32_14 = arith.constant 15 : i32
    %44 = tpu.dynamic_rotate %33 by %c15_i32_14 dim 1 : vector<4x256xf32>, i32 -> vector<4x256xf32>
    %cst_15 = arith.constant 0.000000e+00 : f32
    %45 = vector.shape_cast %14 : vector<1x256xi1> to vector<1x256xi1>
    %46 = vector.broadcast %45 : vector<1x256xi1> to vector<4x256xi1>
    %47 = vector.broadcast %cst_15 : f32 to vector<4x256xf32>
    %48 = arith.select %46, %44, %47 : vector<4x256xi1>, vector<4x256xf32>
    %c1_i32_16 = arith.constant 1 : i32
    %49 = tpu.dynamic_rotate %33 by %c1_i32_16 dim 1 : vector<4x256xf32>, i32 -> vector<4x256xf32>
    %cst_17 = arith.constant 0.000000e+00 : f32
    %50 = vector.shape_cast %16 : vector<1x256xi1> to vector<1x256xi1>
    %51 = vector.broadcast %50 : vector<1x256xi1> to vector<4x256xi1>
    %52 = vector.broadcast %cst_17 : f32 to vector<4x256xf32>
    %53 = arith.select %51, %49, %52 : vector<4x256xi1>, vector<4x256xf32>
    %c255_i32 = arith.constant 255 : i32
    %54 = tpu.dynamic_rotate %33 by %c255_i32 dim 1 : vector<4x256xf32>, i32 -> vector<4x256xf32>
    %cst_18 = arith.constant 0.000000e+00 : f32
    %55 = vector.shape_cast %18 : vector<1x256xi1> to vector<1x256xi1>
    %56 = vector.broadcast %55 : vector<1x256xi1> to vector<4x256xi1>
    %57 = vector.broadcast %cst_18 : f32 to vector<4x256xf32>
    %58 = arith.select %56, %54, %57 : vector<4x256xi1>, vector<4x256xf32>
    %c241_i32 = arith.constant 241 : i32
    %59 = tpu.dynamic_rotate %33 by %c241_i32 dim 1 : vector<4x256xf32>, i32 -> vector<4x256xf32>
    %cst_19 = arith.constant 0.000000e+00 : f32
    %60 = vector.shape_cast %23 : vector<1x256xi1> to vector<1x256xi1>
    %61 = vector.broadcast %60 : vector<1x256xi1> to vector<4x256xi1>
    %62 = vector.broadcast %cst_19 : f32 to vector<4x256xf32>
    %63 = arith.select %61, %59, %62 : vector<4x256xi1>, vector<4x256xf32>
    %c240_i32_20 = arith.constant 240 : i32
    %64 = tpu.dynamic_rotate %33 by %c240_i32_20 dim 1 : vector<4x256xf32>, i32 -> vector<4x256xf32>
    %cst_21 = arith.constant 0.000000e+00 : f32
    %65 = vector.shape_cast %25 : vector<1x256xi1> to vector<1x256xi1>
    %66 = vector.broadcast %65 : vector<1x256xi1> to vector<4x256xi1>
    %67 = vector.broadcast %cst_21 : f32 to vector<4x256xf32>
    %68 = arith.select %66, %64, %67 : vector<4x256xi1>, vector<4x256xf32>
    %c239_i32 = arith.constant 239 : i32
    %69 = tpu.dynamic_rotate %33 by %c239_i32 dim 1 : vector<4x256xf32>, i32 -> vector<4x256xf32>
    %cst_22 = arith.constant 0.000000e+00 : f32
    %70 = vector.shape_cast %30 : vector<1x256xi1> to vector<1x256xi1>
    %71 = vector.broadcast %70 : vector<1x256xi1> to vector<4x256xi1>
    %72 = vector.broadcast %cst_22 : f32 to vector<4x256xf32>
    %73 = arith.select %71, %69, %72 : vector<4x256xi1>, vector<4x256xf32>
    %74 = tpu.concatenate %38, %43, %48, %53, %33, %58, %63, %68, %73, %31 in 0 : vector<4x256xf32>, vector<4x256xf32>, vector<4x256xf32>, vector<4x256xf32>, vector<4x256xf32>, vector<4x256xf32>, vector<4x256xf32>, vector<4x256xf32>, vector<4x256xf32>, vector<1x256xf32> -> vector<37x256xf32>
    %c0_23 = arith.constant 0 : index
    %c0_24 = arith.constant 0 : index
    %75 = vector.load %arg2[%c0_23, %c0_24] : memref<8x37xf32, #tpu.memory_space<vmem>>, vector<8x37xf32>
    %cst_25 = arith.constant dense<0.000000e+00> : vector<8x256xf32>
    %76 = tpu.matmul %75, %74, %cst_25 {dimension_numbers = #tpu.dot_dimension_numbers<[1], [0], [0], [1], [0, 0, 1, 1], [], []>} : vector<8x37xf32>, vector<37x256xf32>, vector<8x256xf32> -> vector<8x256xf32>
    %cst_26 = arith.constant 0.000000e+00 : f32
    %77 = vector.broadcast %cst_26 : f32 to vector<8x256xf32>
    %78 = arith.maximumf %76, %77 : vector<8x256xf32>
    %79 = tpu.concatenate %33, %78 in 0 : vector<4x256xf32>, vector<8x256xf32> -> vector<12x256xf32>
    %c0_27 = arith.constant 0 : index
    %c0_28 = arith.constant 0 : index
    %c0_29 = arith.constant 0 : index
    %80 = vector.load %arg3[%c0_27, %c0_28, %c0_29] : memref<2x12x256xf32, #tpu.memory_space<vmem>>, vector<1x12x256xf32>
    %81 = vector.shape_cast %80 : vector<1x12x256xf32> to vector<12x256xf32>
    %82 = vector.shape_cast %79 : vector<12x256xf32> to vector<1x12x256xf32>
    tpu.vector_store %arg3[%c0_27, %c0_28, %c0_29], %82 {strides = array<i32>} : memref<2x12x256xf32, #tpu.memory_space<vmem>>, vector<1x12x256xf32>,
    %c1 = arith.constant 1 : index
    %c0_30 = arith.constant 0 : index
    %c0_31 = arith.constant 0 : index
    %83 = vector.load %arg1[%c1, %c0_30, %c0_31] : memref<2x4x256xf32, #tpu.memory_space<vmem>>, vector<1x4x256xf32>
    %84 = vector.shape_cast %83 : vector<1x4x256xf32> to vector<4x256xf32>
    %c17_i32_32 = arith.constant 17 : i32
    %85 = tpu.dynamic_rotate %84 by %c17_i32_32 dim 1 : vector<4x256xf32>, i32 -> vector<4x256xf32>
    %cst_33 = arith.constant 0.000000e+00 : f32
    %86 = vector.shape_cast %7 : vector<1x256xi1> to vector<1x256xi1>
    %87 = vector.broadcast %86 : vector<1x256xi1> to vector<4x256xi1>
    %88 = vector.broadcast %cst_33 : f32 to vector<4x256xf32>
    %89 = arith.select %87, %85, %88 : vector<4x256xi1>, vector<4x256xf32>
    %c16_i32_34 = arith.constant 16 : i32
    %90 = tpu.dynamic_rotate %84 by %c16_i32_34 dim 1 : vector<4x256xf32>, i32 -> vector<4x256xf32>
    %cst_35 = arith.constant 0.000000e+00 : f32
    %91 = vector.shape_cast %9 : vector<1x256xi1> to vector<1x256xi1>
    %92 = vector.broadcast %91 : vector<1x256xi1> to vector<4x256xi1>
    %93 = vector.broadcast %cst_35 : f32 to vector<4x256xf32>
    %94 = arith.select %92, %90, %93 : vector<4x256xi1>, vector<4x256xf32>
    %c15_i32_36 = arith.constant 15 : i32
    %95 = tpu.dynamic_rotate %84 by %c15_i32_36 dim 1 : vector<4x256xf32>, i32 -> vector<4x256xf32>
    %cst_37 = arith.constant 0.000000e+00 : f32
    %96 = vector.shape_cast %14 : vector<1x256xi1> to vector<1x256xi1>
    %97 = vector.broadcast %96 : vector<1x256xi1> to vector<4x256xi1>
    %98 = vector.broadcast %cst_37 : f32 to vector<4x256xf32>
    %99 = arith.select %97, %95, %98 : vector<4x256xi1>, vector<4x256xf32>
    %c1_i32_38 = arith.constant 1 : i32
    %100 = tpu.dynamic_rotate %84 by %c1_i32_38 dim 1 : vector<4x256xf32>, i32 -> vector<4x256xf32>
    %cst_39 = arith.constant 0.000000e+00 : f32
    %101 = vector.shape_cast %16 : vector<1x256xi1> to vector<1x256xi1>
    %102 = vector.broadcast %101 : vector<1x256xi1> to vector<4x256xi1>
    %103 = vector.broadcast %cst_39 : f32 to vector<4x256xf32>
    %104 = arith.select %102, %100, %103 : vector<4x256xi1>, vector<4x256xf32>
    %c255_i32_40 = arith.constant 255 : i32
    %105 = tpu.dynamic_rotate %84 by %c255_i32_40 dim 1 : vector<4x256xf32>, i32 -> vector<4x256xf32>
    %cst_41 = arith.constant 0.000000e+00 : f32
    %106 = vector.shape_cast %18 : vector<1x256xi1> to vector<1x256xi1>
    %107 = vector.broadcast %106 : vector<1x256xi1> to vector<4x256xi1>
    %108 = vector.broadcast %cst_41 : f32 to vector<4x256xf32>
    %109 = arith.select %107, %105, %108 : vector<4x256xi1>, vector<4x256xf32>
    %c241_i32_42 = arith.constant 241 : i32
    %110 = tpu.dynamic_rotate %84 by %c241_i32_42 dim 1 : vector<4x256xf32>, i32 -> vector<4x256xf32>
    %cst_43 = arith.constant 0.000000e+00 : f32
    %111 = vector.shape_cast %23 : vector<1x256xi1> to vector<1x256xi1>
    %112 = vector.broadcast %111 : vector<1x256xi1> to vector<4x256xi1>
    %113 = vector.broadcast %cst_43 : f32 to vector<4x256xf32>
    %114 = arith.select %112, %110, %113 : vector<4x256xi1>, vector<4x256xf32>
    %c240_i32_44 = arith.constant 240 : i32
    %115 = tpu.dynamic_rotate %84 by %c240_i32_44 dim 1 : vector<4x256xf32>, i32 -> vector<4x256xf32>
    %cst_45 = arith.constant 0.000000e+00 : f32
    %116 = vector.shape_cast %25 : vector<1x256xi1> to vector<1x256xi1>
    %117 = vector.broadcast %116 : vector<1x256xi1> to vector<4x256xi1>
    %118 = vector.broadcast %cst_45 : f32 to vector<4x256xf32>
    %119 = arith.select %117, %115, %118 : vector<4x256xi1>, vector<4x256xf32>
    %c239_i32_46 = arith.constant 239 : i32
    %120 = tpu.dynamic_rotate %84 by %c239_i32_46 dim 1 : vector<4x256xf32>, i32 -> vector<4x256xf32>
    %cst_47 = arith.constant 0.000000e+00 : f32
    %121 = vector.shape_cast %30 : vector<1x256xi1> to vector<1x256xi1>
    %122 = vector.broadcast %121 : vector<1x256xi1> to vector<4x256xi1>
    %123 = vector.broadcast %cst_47 : f32 to vector<4x256xf32>
    %124 = arith.select %122, %120, %123 : vector<4x256xi1>, vector<4x256xf32>
    %125 = tpu.concatenate %89, %94, %99, %104, %84, %109, %114, %119, %124, %31 in 0 : vector<4x256xf32>, vector<4x256xf32>, vector<4x256xf32>, vector<4x256xf32>, vector<4x256xf32>, vector<4x256xf32>, vector<4x256xf32>, vector<4x256xf32>, vector<4x256xf32>, vector<1x256xf32> -> vector<37x256xf32>
    %c0_48 = arith.constant 0 : index
    %c0_49 = arith.constant 0 : index
    %126 = vector.load %arg2[%c0_48, %c0_49] : memref<8x37xf32, #tpu.memory_space<vmem>>, vector<8x37xf32>
    %cst_50 = arith.constant dense<0.000000e+00> : vector<8x256xf32>
    %127 = tpu.matmul %126, %125, %cst_50 {dimension_numbers = #tpu.dot_dimension_numbers<[1], [0], [0], [1], [0, 0, 1, 1], [], []>} : vector<8x37xf32>, vector<37x256xf32>, vector<8x256xf32> -> vector<8x256xf32>
    %cst_51 = arith.constant 0.000000e+00 : f32
    %128 = vector.broadcast %cst_51 : f32 to vector<8x256xf32>
    %129 = arith.maximumf %127, %128 : vector<8x256xf32>
    %130 = tpu.concatenate %84, %129 in 0 : vector<4x256xf32>, vector<8x256xf32> -> vector<12x256xf32>
    %c1_52 = arith.constant 1 : index
    %c0_53 = arith.constant 0 : index
    %c0_54 = arith.constant 0 : index
    %131 = vector.load %arg3[%c1_52, %c0_53, %c0_54] : memref<2x12x256xf32, #tpu.memory_space<vmem>>, vector<1x12x256xf32>
    %132 = vector.shape_cast %131 : vector<1x12x256xf32> to vector<12x256xf32>
    %133 = vector.shape_cast %130 : vector<12x256xf32> to vector<1x12x256xf32>
    tpu.vector_store %arg3[%c1_52, %c0_53, %c0_54], %133 {strides = array<i32>} : memref<2x12x256xf32, #tpu.memory_space<vmem>>, vector<1x12x256xf32>,
    return
  }
  func.func @transform_0(%arg0: i32) -> (i32, i32, i32) {
    %c0_i32 = arith.constant 0 : i32
    %c0_i32_0 = arith.constant 0 : i32
    %c0_i32_1 = arith.constant 0 : i32
    return %arg0, %c0_i32, %c0_i32_0 : i32, i32, i32
  }
  func.func @transform_1(%arg0: i32) -> (i32, i32) {
    %c0_i32 = arith.constant 0 : i32
    %c0_i32_0 = arith.constant 0 : i32
    %c0_i32_1 = arith.constant 0 : i32
    return %c0_i32, %c0_i32_0 : i32, i32
  }
  func.func @transform_2(%arg0: i32) -> (i32, i32, i32) {
    %c0_i32 = arith.constant 0 : i32
    %c0_i32_0 = arith.constant 0 : i32
    %c0_i32_1 = arith.constant 0 : i32
    return %arg0, %c0_i32, %c0_i32_0 : i32, i32, i32
  }
}

</mosaic_0001>

<llo_original>
// kernel: tpu_custom_call.1
$region0: #{tpu_custom_call.1}
  #allocation0 [shape = 'u32[]', space=smem, size = 0x4, offset = 0x4, fixed_abs, tag = 'smem constant byte address 0x4 - core index']
  #allocation1 [shape = 'u32[144,128]{1,0:T(1,128)}', space=vmem, size = 0x12000, scoped, tag = 'internal scratch']
  %s0 = inlined_call_operand.hbm [shape: f32[2,4,256], index: 0, kind: input, shape index: {}]
  %s1 = inlined_call_operand.hbm [shape: f32[8,37], index: 1, kind: input, shape index: {}]
  %s2 = inlined_call_operand.vmem [shape: f32[2,12,256], index: 2, kind: output, shape index: {}]
  %s3 = sld [smem:[#allocation0]]
  $region26: #{tpu_custom_call.1} parent=0
    _
  %s5 = ssub.s32 1, %s3
  %s6 = scalar_select 0, %s5, %s3
  $region1: #{tpu_custom_call.1} parent=0
    #allocation2 [shape = 'u8[8192]{0}', space=vmem, size = 0x2000, scoped, tag = 'input window, operand 0, single buffered']
    #allocation3 [shape = 's32[1]{0}', space=sflag, size = 0x4, scoped, tag = 'scoped memory for tpu_custom_call.1']
    #allocation4 [shape = 'u8[4096]{0}', space=vmem, size = 0x1000, scoped, tag = 'input window, operand 1, single buffered']
    #allocation5 [shape = 's32[1]{0}', space=sflag, size = 0x4, scoped, tag = 'scoped memory for tpu_custom_call.1']
    %7 = vsyncpa [#allocation3], 0
    %8 = vsyncpa [#allocation5], 0
    // Predicated region
    $region2: #{tpu_custom_call.1} parent=1 // pred_check
      _
    $region3: #{tpu_custom_call.1} parent=1 // pred_check_branch
      %10 = sbr.rel (0) target = $region5
    $region4: #{tpu_custom_call.1} parent=1 // pred_region
      %s12 = ssub.s32 256, 256
      %13 = vsyncadd [#allocation3], %s12
      %s14 = sshll.u32 [#allocation2], 4
      %s15 = int_to_ptr.vmem [resolvable:$true] %s14
      %20 = dma.hbm_to_vmem [thread:$0]  %s0, 256, %s15, [#allocation3], 128, 128, 8
    $region5: #{tpu_custom_call.1} parent=1 // pred_fallthru
      _
    // Predicated region
    $region6: #{tpu_custom_call.1} parent=1 // pred_check
      _
    $region7: #{tpu_custom_call.1} parent=1 // pred_check_branch
      %22 = sbr.rel (0) target = $region9
    $region8: #{tpu_custom_call.1} parent=1 // pred_region
      %s24 = ssub.s32 128, 128
      %25 = vsyncadd [#allocation5], %s24
      %s27 = sshll.u32 [#allocation4], 4
      %s28 = int_to_ptr.vmem [resolvable:$true] %s27
      %30 = dma.hbm_to_vmem [thread:$0]  %s1, 128, %s28, [#allocation5]
    $region9: #{tpu_custom_call.1} parent=1 // pred_fallthru
      _
    // Predicated region
    $region10: #{tpu_custom_call.1} parent=1 // pred_check
      _
    $region11: #{tpu_custom_call.1} parent=1 // pred_check_branch
      %32 = sbr.rel (0) target = $region13
    $region12: #{tpu_custom_call.1} parent=1 // pred_region
      %33 = dma.done [#allocation3], 256
    $region13: #{tpu_custom_call.1} parent=1 // pred_fallthru
      _
    // Predicated region
    $region14: #{tpu_custom_call.1} parent=1 // pred_check
      _
    $region15: #{tpu_custom_call.1} parent=1 // pred_check_branch
      %35 = sbr.rel (0) target = $region17
    $region16: #{tpu_custom_call.1} parent=1 // pred_region
      %36 = dma.done [#allocation5], 128
    $region17: #{tpu_custom_call.1} parent=1 // pred_fallthru
      _
    %v37 = vlaneseq
    %v38 = vand.u32 %v37, 127
    %v39 = vadd.s32 %v38, 128
    %v40 = vand.u32 %v38, 15
    %v41 = vand.u32 %v39, 15
    %vm42 = vcmp.ge.s32.totalorder %v38, 16
    %vm43 = vcmp.ge.s32.totalorder %v39, 16
    %vm44 = vcmp.ge.s32.totalorder %v40, 1
    %vm45 = vcmp.ge.s32.totalorder %v41, 1
    %vm46 = vmand %vm42, %vm44
    %vm47 = vmand %vm43, %vm45
    %vm48 = vcmp.lt.s32.totalorder %v40, 15
    %vm49 = vcmp.lt.s32.totalorder %v41, 15
    %vm50 = vmand %vm42, %vm48
    %vm51 = vmand %vm43, %vm49
    %vm52 = vcmp.lt.s32.totalorder %v38, 240
    %vm53 = vcmp.lt.s32.totalorder %v39, 240
    %vm54 = vmand %vm52, %vm44
    %vm55 = vmand %vm53, %vm45
    %vm56 = vmand %vm52, %vm48
    %vm57 = vmand %vm53, %vm49
    %v58 = vld [vmem:[#allocation2] sm:$0xff]
    %v60 = vcombine.high %v58, %v58
    %62 = vrot.lane.b32.xlu0 %v58, 17
    %v63 = vpop.permute.xlu0 %62
    %64 = vrot.lane.b32.xlu0 %v60, 17
    %v65 = vpop.permute.xlu0 %64
    %vm66 = vcmp.lt.s32.totalorder %v38, 17
    %v67 = vsel %vm66, %v63, %v65
    %v68 = vsel %vm66, %v65, %v63
    %v69 = vsel %vm46, 1, 0
    %v70 = vsel %vm47, 1, 0
    %vm71 = vcmp.eq.s32.totalorder %v69, 1
    %vm72 = vcmp.eq.s32.totalorder %v70, 1
    %v73 = vsel %vm71, %v68, 0.0
    %v74 = vsel %vm72, %v67, 0.0
    %75 = vrot.lane.b32.xlu0 %v58, 16
    %v76 = vpop.permute.xlu0 %75
    %77 = vrot.lane.b32.xlu0 %v60, 16
    %v78 = vpop.permute.xlu0 %77
    %vm79 = vcmp.lt.s32.totalorder %v38, 16
    %v80 = vsel %vm79, %v76, %v78
    %v81 = vsel %vm79, %v78, %v76
    %v82 = vsel %vm42, 1, 0
    %v83 = vsel %vm43, 1, 0
    %vm84 = vcmp.eq.s32.totalorder %v82, 1
    %vm85 = vcmp.eq.s32.totalorder %v83, 1
    %v86 = vsel %vm84, %v81, 0.0
    %v87 = vsel %vm85, %v80, 0.0
    %88 = vrot.lane.b32.xlu0 %v58, 15
    %v89 = vpop.permute.xlu0 %88
    %90 = vrot.lane.b32.xlu0 %v60, 15
    %v91 = vpop.permute.xlu0 %90
    %vm92 = vcmp.lt.s32.totalorder %v38, 15
    %v93 = vsel %vm92, %v89, %v91
    %v94 = vsel %vm92, %v91, %v89
    %v95 = vsel %vm50, 1, 0
    %v96 = vsel %vm51, 1, 0
    %vm97 = vcmp.eq.s32.totalorder %v95, 1
    %vm98 = vcmp.eq.s32.totalorder %v96, 1
    %v99 = vsel %vm97, %v94, 0.0
    %v100 = vsel %vm98, %v93, 0.0
    %101 = vrot.lane.b32.xlu0 %v58, 1
    %v102 = vpop.permute.xlu0 %101
    %103 = vrot.lane.b32.xlu0 %v60, 1
    %v104 = vpop.permute.xlu0 %103
    %vm105 = vcmp.lt.s32.totalorder %v38, 1
    %v106 = vsel %vm105, %v102, %v104
    %v107 = vsel %vm105, %v104, %v102
    %v108 = vsel %vm44, 1, 0
    %v109 = vsel %vm45, 1, 0
    %vm110 = vcmp.eq.s32.totalorder %v108, 1
    %vm111 = vcmp.eq.s32.totalorder %v109, 1
    %v112 = vsel %vm110, %v107, 0.0
    %v113 = vsel %vm111, %v106, 0.0
    %114 = vrot.lane.b32.xlu0 %v58, 127
    %v115 = vpop.permute.xlu0 %114
    %116 = vrot.lane.b32.xlu0 %v60, 127
    %v117 = vpop.permute.xlu0 %116
    %vm118 = vcmp.lt.s32.totalorder %v38, 127
    %v119 = vsel %vm118, %v115, %v117
    %v120 = vsel %vm118, %v117, %v115
    %v121 = vsel %vm48, 1, 0
    %v122 = vsel %vm49, 1, 0
    %vm123 = vcmp.eq.s32.totalorder %v121, 1
    %vm124 = vcmp.eq.s32.totalorder %v122, 1
    %v125 = vsel %vm123, %v119, 0.0
    %v126 = vsel %vm124, %v120, 0.0
    %127 = vrot.lane.b32.xlu0 %v58, 113
    %v128 = vpop.permute.xlu0 %127
    %129 = vrot.lane.b32.xlu0 %v60, 113
    %v130 = vpop.permute.xlu0 %129
    %vm131 = vcmp.lt.s32.totalorder %v38, 113
    %v132 = vsel %vm131, %v128, %v130
    %v133 = vsel %vm131, %v130, %v128
    %v134 = vsel %vm54, 1, 0
    %v135 = vsel %vm55, 1, 0
    %vm136 = vcmp.eq.s32.totalorder %v134, 1
    %vm137 = vcmp.eq.s32.totalorder %v135, 1
    %v138 = vsel %vm136, %v132, 0.0
    %v139 = vsel %vm137, %v133, 0.0
    %140 = vrot.lane.b32.xlu0 %v58, 112
    %v141 = vpop.permute.xlu0 %140
    %142 = vrot.lane.b32.xlu0 %v60, 112
    %v143 = vpop.permute.xlu0 %142
    %vm144 = vcmp.lt.s32.totalorder %v38, 112
    %v145 = vsel %vm144, %v141, %v143
    %v146 = vsel %vm144, %v143, %v141
    %v147 = vsel %vm52, 1, 0
    %v148 = vsel %vm53, 1, 0
    %vm149 = vcmp.eq.s32.totalorder %v147, 1
    %vm150 = vcmp.eq.s32.totalorder %v148, 1
    %v151 = vsel %vm149, %v145, 0.0
    %v152 = vsel %vm150, %v146, 0.0
    %153 = vrot.lane.b32.xlu0 %v58, 111
    %v154 = vpop.permute.xlu0 %153
    %155 = vrot.lane.b32.xlu0 %v60, 111
    %v156 = vpop.permute.xlu0 %155
    %vm157 = vcmp.lt.s32.totalorder %v38, 111
    %v158 = vsel %vm157, %v154, %v156
    %v159 = vsel %vm157, %v156, %v154
    %v160 = vsel %vm56, 1, 0
    %v161 = vsel %vm57, 1, 0
    %vm162 = vcmp.eq.s32.totalorder %v160, 1
    %vm163 = vcmp.eq.s32.totalorder %v161, 1
    %v164 = vsel %vm162, %v158, 0.0
    %v165 = vsel %vm163, %v159, 0.0
    %v168 = vrot.slane %v86, 4
    %v169 = vrot.slane %v87, 4
    %v174 = vrot.slane %v112, 4
    %v175 = vrot.slane %v113, 4
    %v180 = vrot.slane %v125, 4
    %v181 = vrot.slane %v126, 4
    %v186 = vrot.slane %v151, 4
    %v187 = vrot.slane %v152, 4
    %vm190 = vcmask 1043456
    %v191 = vsel %vm190, %v73, %v168
    %v192 = vsel %vm190, %v74, %v169
    %v193 = vsel %vm190, %v99, %v174
    %v194 = vsel %vm190, %v100, %v175
    %v195 = vsel %vm190, %v58, %v180
    %v196 = vsel %vm190, %v60, %v181
    %v197 = vsel %vm190, %v138, %v186
    %v198 = vsel %vm190, %v139, %v187
    %v199 = vsel %vm190, %v164, 1.0
    %v200 = vsel %vm190, %v165, 1.0
    %v201 = vld [vmem:[#allocation4] sm:$0xff]
    %vm202 = vcmask 302080
    %v204 = vsel %vm202, %v201, 0
    %vm206 = vcmask 1044480
    %v208 = vsel %vm206, %v199, 0
    %v211 = vsel %vm206, %v200, 0
    %213 = vmatprep.subr.mxu0 %v192
    %214 = vmatpush1.msra.mxu0 %v191
    %215 = vmatprep.subr.mxu0 %v194
    %216 = vmatpush1.msra.mxu0 %v193
    %217 = vmatprep.subr.mxu0 %v196
    %218 = vmatpush1.msra.mxu0 %v195
    %219 = vmatprep.subr.mxu0 %v198
    %220 = vmatpush1.msra.mxu0 %v197
    %221 = vmatprep.subr.mxu0 %v211
    %222 = vmatpush1.msra.mxu0 %v208
    %223 = vmatprep.subr.mxu0 0.0
    %224 = vmatpush1.msra.mxu0 0.0
    %225 = vmatprep.subr.mxu0 0.0
    %226 = vmatpush1.msra.mxu0 0.0
    %227 = vmatprep.subr.mxu0 0.0
    %228 = vmatpush1.msra.mxu0 0.0
    %229 = vmatprep.subr.mxu0 0.0
    %230 = vmatpush1.msra.mxu0 0.0
    %231 = vmatprep.subr.mxu0 0.0
    %232 = vmatpush1.msra.mxu0 0.0
    %233 = vmatprep.subr.mxu0 0.0
    %234 = vmatpush1.msra.mxu0 0.0
    %235 = vmatprep.subr.mxu0 0.0
    %236 = vmatpush1.msra.mxu0 0.0
    %237 = vmatprep.subr.mxu0 0.0
    %238 = vmatpush1.msra.mxu0 0.0
    %239 = vmatprep.subr.mxu0 0.0
    %240 = vmatpush1.msra.mxu0 0.0
    %241 = vmatprep.subr.mxu0 0.0
    %242 = vmatpush1.msra.mxu0 0.0
    %243 = vmatprep.subr.mxu0 0.0
    %244 = vmatpush1.msra.mxu0 0.0
    %245 = vmatprep.subr.mxu0 0.0
    %246 = vmatpush1.msra.mxu0 0.0
    %247 = vmatprep.subr.mxu0 0.0
    %248 = vmatpush1.msra.mxu0 0.0
    %249 = vmatprep.subr.mxu0 0.0
    %250 = vmatpush1.msra.mxu0 0.0
    %251 = vmatprep.subr.mxu0 0.0
    %252 = vmatpush1.msra.mxu0 0.0
    %253 = vmatprep.subr.mxu0 0.0
    %254 = vmatpush1.msra.mxu0 0.0
    %255 = vmatprep.subr.mxu0 0.0
    %256 = vmatpush1.msra.mxu0 0.0
    %257 = vmatprep.subr.mxu0 0.0
    %258 = vmatpush1.msra.mxu0 0.0
    %259 = vmatprep.subr.mxu0 0.0
    %260 = vmatpush1.msra.mxu0 0.0
    %261 = vmatprep.subr.mxu0 0.0
    %262 = vmatpush1.msra.mxu0 0.0
    %263 = vmatprep.subr.mxu0 0.0
    %264 = vmatpush1.msra.mxu0 0.0
    %265 = vmatprep.subr.mxu0 0.0
    %266 = vmatpush1.msra.mxu0 0.0
    %267 = vmatprep.subr.mxu0 0.0
    %268 = vmatpush1.msra.mxu0 0.0
    %269 = vmatprep.subr.mxu0 0.0
    %270 = vmatpush1.msra.mxu0 0.0
    %271 = vmatprep.subr.mxu0 0.0
    %272 = vmatpush1.msra.mxu0 0.0
    %273 = vmatprep.subr.mxu0 0.0
    %274 = vmatpush1.msra.mxu0 0.0
    %275 = vmatprep.subr.mxu0 0.0
    %276 = vmatpush1.msra.mxu0 0.0
    %277 = vmatprep.mubr.f32.mxu0 0.0
    %278 = vmatmul.mubr.f32.gmra.mrb[0].mxu0 %v204
    %v279 = vpop.f32.mrb[0].mxu0
    %v280 = vadd.f32 0.0, %v279
    %v281 = vpop.f32.mrb[0].mxu0
    %v282 = vadd.f32 0.0, %v281
    %283 = vdwg.mxu0
    %v284 = vmax.f32 %v280, 0.0
    %v285 = vmax.f32 %v282, 0.0
    %v288 = vrot.slane %v284, 4
    %v289 = vrot.slane %v285, 4
    %v292 = vsel %vm190, %v58, %v288
    %v293 = vsel %vm190, %v60, %v289
    %294 = vst [vmem:[%s2] sm:$0xff] %v292
    %295 = vst [vmem:[%s2 + $0x8] sm:$0xff] %v293
    %296 = vst [vmem:[%s2 + $0x10] sm:$0xf] %v288
    %297 = vst [vmem:[%s2 + $0x18] sm:$0xf] %v289
    %s298 = scalar_lea.vmem [#allocation2], 8
    %v299 = vld [vmem:[%s298] sm:$0xff]
    %v301 = vcombine.high %v299, %v299
    %303 = vrot.lane.b32.xlu0 %v299, 17
    %v304 = vpop.permute.xlu0 %303
    %305 = vrot.lane.b32.xlu0 %v301, 17
    %v306 = vpop.permute.xlu0 %305
    %v307 = vsel %vm66, %v304, %v306
    %v308 = vsel %vm66, %v306, %v304
    %v309 = vsel %vm71, %v308, 0.0
    %v310 = vsel %vm72, %v307, 0.0
    %311 = vrot.lane.b32.xlu0 %v299, 16
    %v312 = vpop.permute.xlu0 %311
    %313 = vrot.lane.b32.xlu0 %v301, 16
    %v314 = vpop.permute.xlu0 %313
    %v315 = vsel %vm79, %v312, %v314
    %v316 = vsel %vm79, %v314, %v312
    %v317 = vsel %vm84, %v316, 0.0
    %v318 = vsel %vm85, %v315, 0.0
    %319 = vrot.lane.b32.xlu0 %v299, 15
    %v320 = vpop.permute.xlu0 %319
    %321 = vrot.lane.b32.xlu0 %v301, 15
    %v322 = vpop.permute.xlu0 %321
    %v323 = vsel %vm92, %v320, %v322
    %v324 = vsel %vm92, %v322, %v320
    %v325 = vsel %vm97, %v324, 0.0
    %v326 = vsel %vm98, %v323, 0.0
    %327 = vrot.lane.b32.xlu0 %v299, 1
    %v328 = vpop.permute.xlu0 %327
    %329 = vrot.lane.b32.xlu0 %v301, 1
    %v330 = vpop.permute.xlu0 %329
    %v331 = vsel %vm105, %v328, %v330
    %v332 = vsel %vm105, %v330, %v328
    %v333 = vsel %vm110, %v332, 0.0
    %v334 = vsel %vm111, %v331, 0.0
    %335 = vrot.lane.b32.xlu0 %v299, 127
    %v336 = vpop.permute.xlu0 %335
    %337 = vrot.lane.b32.xlu0 %v301, 127
    %v338 = vpop.permute.xlu0 %337
    %v339 = vsel %vm118, %v336, %v338
    %v340 = vsel %vm118, %v338, %v336
    %v341 = vsel %vm123, %v339, 0.0
    %v342 = vsel %vm124, %v340, 0.0
    %343 = vrot.lane.b32.xlu0 %v299, 113
    %v344 = vpop.permute.xlu0 %343
    %345 = vrot.lane.b32.xlu0 %v301, 113
    %v346 = vpop.permute.xlu0 %345
    %v347 = vsel %vm131, %v344, %v346
    %v348 = vsel %vm131, %v346, %v344
    %v349 = vsel %vm136, %v347, 0.0
    %v350 = vsel %vm137, %v348, 0.0
    %351 = vrot.lane.b32.xlu0 %v299, 112
    %v352 = vpop.permute.xlu0 %351
    %353 = vrot.lane.b32.xlu0 %v301, 112
    %v354 = vpop.permute.xlu0 %353
    %v355 = vsel %vm144, %v352, %v354
    %v356 = vsel %vm144, %v354, %v352
    %v357 = vsel %vm149, %v355, 0.0
    %v358 = vsel %vm150, %v356, 0.0
    %359 = vrot.lane.b32.xlu0 %v299, 111
    %v360 = vpop.permute.xlu0 %359
    %361 = vrot.lane.b32.xlu0 %v301, 111
    %v362 = vpop.permute.xlu0 %361
    %v363 = vsel %vm157, %v360, %v362
    %v364 = vsel %vm157, %v362, %v360
    %v365 = vsel %vm162, %v363, 0.0
    %v366 = vsel %vm163, %v364, 0.0
    %v369 = vrot.slane %v317, 4
    %v370 = vrot.slane %v318, 4
    %v375 = vrot.slane %v333, 4
    %v376 = vrot.slane %v334, 4
    %v381 = vrot.slane %v341, 4
    %v382 = vrot.slane %v342, 4
    %v387 = vrot.slane %v357, 4
    %v388 = vrot.slane %v358, 4
    %v391 = vsel %vm190, %v309, %v369
    %v392 = vsel %vm190, %v310, %v370
    %v393 = vsel %vm190, %v325, %v375
    %v394 = vsel %vm190, %v326, %v376
    %v395 = vsel %vm190, %v299, %v381
    %v396 = vsel %vm190, %v301, %v382
    %v397 = vsel %vm190, %v349, %v387
    %v398 = vsel %vm190, %v350, %v388
    %v399 = vsel %vm190, %v365, 1.0
    %v400 = vsel %vm190, %v366, 1.0
    %v401 = vld [vmem:[#allocation4] sm:$0xff]
    %v403 = vsel %vm202, %v401, 0
    %v406 = vsel %vm206, %v399, 0
    %v409 = vsel %vm206, %v400, 0
    %411 = vmatprep.subr.mxu0 %v392
    %412 = vmatpush1.msra.mxu0 %v391
    %413 = vmatprep.subr.mxu0 %v394
    %414 = vmatpush1.msra.mxu0 %v393
    %415 = vmatprep.subr.mxu0 %v396
    %416 = vmatpush1.msra.mxu0 %v395
    %417 = vmatprep.subr.mxu0 %v398
    %418 = vmatpush1.msra.mxu0 %v397
    %419 = vmatprep.subr.mxu0 %v409
    %420 = vmatpush1.msra.mxu0 %v406
    %421 = vmatprep.subr.mxu0 0.0
    %422 = vmatpush1.msra.mxu0 0.0
    %423 = vmatprep.subr.mxu0 0.0
    %424 = vmatpush1.msra.mxu0 0.0
    %425 = vmatprep.subr.mxu0 0.0
    %426 = vmatpush1.msra.mxu0 0.0
    %427 = vmatprep.subr.mxu0 0.0
    %428 = vmatpush1.msra.mxu0 0.0
    %429 = vmatprep.subr.mxu0 0.0
    %430 = vmatpush1.msra.mxu0 0.0
    %431 = vmatprep.subr.mxu0 0.0
    %432 = vmatpush1.msra.mxu0 0.0
    %433 = vmatprep.subr.mxu0 0.0
    %434 = vmatpush1.msra.mxu0 0.0
    %435 = vmatprep.subr.mxu0 0.0
    %436 = vmatpush1.msra.mxu0 0.0
    %437 = vmatprep.subr.mxu0 0.0
    %438 = vmatpush1.msra.mxu0 0.0
    %439 = vmatprep.subr.mxu0 0.0
    %440 = vmatpush1.msra.mxu0 0.0
    %441 = vmatprep.subr.mxu0 0.0
    %442 = vmatpush1.msra.mxu0 0.0
    %443 = vmatprep.subr.mxu0 0.0
    %444 = vmatpush1.msra.mxu0 0.0
    %445 = vmatprep.subr.mxu0 0.0
    %446 = vmatpush1.msra.mxu0 0.0
    %447 = vmatprep.subr.mxu0 0.0
    %448 = vmatpush1.msra.mxu0 0.0
    %449 = vmatprep.subr.mxu0 0.0
    %450 = vmatpush1.msra.mxu0 0.0
    %451 = vmatprep.subr.mxu0 0.0
    %452 = vmatpush1.msra.mxu0 0.0
    %453 = vmatprep.subr.mxu0 0.0
    %454 = vmatpush1.msra.mxu0 0.0
    %455 = vmatprep.subr.mxu0 0.0
    %456 = vmatpush1.msra.mxu0 0.0
    %457 = vmatprep.subr.mxu0 0.0
    %458 = vmatpush1.msra.mxu0 0.0
    %459 = vmatprep.subr.mxu0 0.0
    %460 = vmatpush1.msra.mxu0 0.0
    %461 = vmatprep.subr.mxu0 0.0
    %462 = vmatpush1.msra.mxu0 0.0
    %463 = vmatprep.subr.mxu0 0.0
    %464 = vmatpush1.msra.mxu0 0.0
    %465 = vmatprep.subr.mxu0 0.0
    %466 = vmatpush1.msra.mxu0 0.0
    %467 = vmatprep.subr.mxu0 0.0
    %468 = vmatpush1.msra.mxu0 0.0
    %469 = vmatprep.subr.mxu0 0.0
    %470 = vmatpush1.msra.mxu0 0.0
    %471 = vmatprep.subr.mxu0 0.0
    %472 = vmatpush1.msra.mxu0 0.0
    %473 = vmatprep.subr.mxu0 0.0
    %474 = vmatpush1.msra.mxu0 0.0
    %475 = vmatprep.mubr.f32.mxu0 0.0
    %476 = vmatmul.mubr.f32.gmra.mrb[0].mxu0 %v403
    %v477 = vpop.f32.mrb[0].mxu0
    %v478 = vadd.f32 0.0, %v477
    %v479 = vpop.f32.mrb[0].mxu0
    %v480 = vadd.f32 0.0, %v479
    %481 = vdwg.mxu0
    %v482 = vmax.f32 %v478, 0.0
    %v483 = vmax.f32 %v480, 0.0
    %v486 = vrot.slane %v482, 4
    %v487 = vrot.slane %v483, 4
    %v490 = vsel %vm190, %v299, %v486
    %v491 = vsel %vm190, %v301, %v487
    %s492 = scalar_lea.vmem %s2, 32
    %493 = vst [vmem:[%s492] sm:$0xff] %v490
    %494 = vst [vmem:[%s492 + $0x8] sm:$0xff] %v491
    %495 = vst [vmem:[%s492 + $0x10] sm:$0xf] %v486
    %496 = vst [vmem:[%s492 + $0x18] sm:$0xf] %v487
    // Predicated region
    $region18: #{tpu_custom_call.1} parent=1 // pred_check
      _
    $region19: #{tpu_custom_call.1} parent=1 // pred_check_branch
      %498 = sbr.rel (0) target = $region21
    $region20: #{tpu_custom_call.1} parent=1 // pred_region
      _
    $region21: #{tpu_custom_call.1} parent=1 // pred_fallthru
      _
    // Predicated region
    $region22: #{tpu_custom_call.1} parent=1 // pred_check
      _
    $region23: #{tpu_custom_call.1} parent=1 // pred_check_branch
      %500 = sbr.rel (0) target = $region25
    $region24: #{tpu_custom_call.1} parent=1 // pred_region
      _
    $region25: #{tpu_custom_call.1} parent=1 // pred_fallthru
      _
    %501 = vsyncpa [#allocation3], 1
    %502 = vsyncpa [#allocation5], 1

</llo_original>
